<compile_context>
chip_gen: v7x
topology: tpu7x:2x2x1
jax: 0.10.0
libtpu: 0.0.40
codegen_flags: <defaults>
</compile_context>

<pallas_src>
import math
import numpy as np
import jax
import jax.numpy as jnp
from jax.experimental import pallas as pl
from jax.experimental.pallas import tpu as pltpu


# ---------------------------------------------------------------------------
# Parameter preprocessing (plain JAX — tiny filter tensors, not the hot path)
# ---------------------------------------------------------------------------
def rot_img(x, theta):
    """JAX port of PyTorch rot_img: F.affine_grid + F.grid_sample
    (bilinear, padding_mode='zeros', align_corners=False). x: [N, C, H, W]."""
    N, C, H, W = x.shape
    cos_t = jnp.float32(np.cos(theta))
    sin_t = jnp.float32(np.sin(theta))
    # affine_grid base coordinates, align_corners=False: (2*j + 1)/W - 1
    xs = (2.0 * jnp.arange(W, dtype=jnp.float32) + 1.0) / W - 1.0
    ys = (2.0 * jnp.arange(H, dtype=jnp.float32) + 1.0) / H - 1.0
    gy, gx = jnp.meshgrid(ys, xs, indexing="ij")            # (H, W)
    grid_x = cos_t * gx - sin_t * gy
    grid_y = sin_t * gx + cos_t * gy
    # grid_sample unnormalize, align_corners=False
    ix = (grid_x + 1.0) * W / 2.0 - 0.5
    iy = (grid_y + 1.0) * H / 2.0 - 0.5
    x0 = jnp.floor(ix)
    y0 = jnp.floor(iy)
    x1 = x0 + 1.0
    y1 = y0 + 1.0
    wx1 = ix - x0
    wx0 = 1.0 - wx1
    wy1 = iy - y0
    wy0 = 1.0 - wy1

    def gather(yy, xx):
        valid = (xx >= 0) & (xx <= W - 1) & (yy >= 0) & (yy <= H - 1)
        xc = jnp.clip(xx, 0, W - 1).astype(jnp.int32)
        yc = jnp.clip(yy, 0, H - 1).astype(jnp.int32)
        vals = x[:, :, yc, xc]                               # (N, C, H, W)
        return vals * valid.astype(x.dtype)

    return (gather(y0, x0) * (wy0 * wx0)
            + gather(y0, x1) * (wy0 * wx1)
            + gather(y1, x0) * (wy1 * wx0)
            + gather(y1, x1) * (wy1 * wx1))


def generate_filter_bank(kernel, group_order):
    """kernel: (nfb, Cout, Cin, k, k) -> (nfb, Cout, G, Cin, k, k)"""
    nfb, Cout, Cin, k, _ = kernel.shape
    weights = kernel.reshape(nfb * Cout, Cin, k, k)
    fb = jnp.stack([rot_img(weights, -np.pi * 2 / group_order * i)
                    for i in range(group_order)])            # (G, nfb*Cout, Cin, k, k)
    fb = jnp.transpose(fb, (1, 0, 2, 3, 4)).reshape(
        nfb, Cout, group_order, Cin, k, k)
    return fb


# ---------------------------------------------------------------------------
# Pallas kernel: pure dense matmul + fused ReLU.  One invocation for the whole
# batch; the per-image stores are lane-aligned slices of the single dot result.
# ---------------------------------------------------------------------------
def _matmul_relu_kernel_factory(N, HoWo, activation):
    def kernel(w_ref, p_ref, o_ref):
        # single MXU dot over the whole batch:
        #   (Cmul, K) @ (K, N*Ho*Wo) -> (Cmul, N*Ho*Wo), f32 accumulation
        acc = jnp.dot(w_ref[...], p_ref[...],
                      preferred_element_type=jnp.float32)
        if activation:
            acc = jnp.maximum(acc, 0.0)
        # Scatter per-image lane slices into NCHW-ordered output memory.
        # At the toy size HoWo = 256 (multiple of 128) so slices are vreg /
        # lane-block aligned -> unmasked dense vst.
        for n in range(N):
            o_ref[n] = acc[:, n * HoWo:(n + 1) * HoWo].astype(o_ref.dtype)
    return kernel


def relaxed_rot_lift_conv2d(x, kernel, relaxed_weights, group_order,
                            activation=True, compute_dtype=None):
    """Forward pass of RelaxedRotLiftConv2d.
    x: (N, Cin, H, W) float32 (NCHW, as in PyTorch).
    compute_dtype: optional bf16 cast of activations/weights (valid on
    v5e/v6e/v7x — the MXU accepts bf16 operands on all three generations);
    accumulation stays f32 inside the kernel."""
    nfb, Cout, Cin, k, _ = kernel.shape
    N, _, H, W = x.shape
    p = (k - 1) // 2                   # NOTE: assumes odd k ('same' padding)
    Cmul = Cout * group_order
    K = k * k * Cin

    # relaxed combination of the rotated filter bank (weight-space glue)
    fb = generate_filter_bank(kernel, group_order)           # (nfb, Cout, G, Cin, k, k)
    w = jnp.einsum("na,noaikl->oaikl", relaxed_weights, fb)  # (Cout, G, Cin, k, k)
    w = w.reshape(Cmul, Cin, k, k)                           # OIHW
    # im2col weight matrix; contraction ordering (ky, kx, cin)
    w_mat = jnp.transpose(w, (0, 2, 3, 1)).reshape(Cmul, K)

    # spatial zero-pad (same as F.conv2d padding=(k-1)//2)
    x_pad = jnp.pad(x, ((0, 0), (0, 0), (p, p), (p, p)))
    Hp, Wp = H + 2 * p, W + 2 * p
    Ho, Wo = Hp - k + 1, Wp - k + 1
    HoWo = Ho * Wo

    # im2col patch matrix built ONCE in the wrapper (XLA).  K ordering
    # (ky, kx, cin) matches w_mat; lane ordering (n, ho, wo) means the kernel's
    # per-image lane slices land directly in NCHW output memory.  ~k*k x
    # activation blow-up (~72 KB at the toy size) — keeps the kernel free of
    # the lane-unaligned tap-slice/concat relayout flagged in review.
    taps = [x_pad[:, :, ky:ky + Ho, kx:kx + Wo]              # (N, Cin, Ho, Wo)
            for ky in range(k) for kx in range(k)]
    patches = jnp.stack(taps, axis=0)                        # (k*k, N, Cin, Ho, Wo)
    patches = jnp.transpose(patches, (0, 2, 1, 3, 4))        # (k*k, Cin, N, Ho, Wo)
    patches = patches.reshape(K, N * HoWo)                   # lane-dense RHS

    if compute_dtype is not None:                            # bf16 path (all gens)
        patches = patches.astype(compute_dtype)
        w_mat = w_mat.astype(compute_dtype)

    cost = pl.CostEstimate(
        flops=2 * Cmul * K * N * HoWo,
        transcendentals=0,
        bytes_accessed=(patches.size * patches.dtype.itemsize
                        + w_mat.size * w_mat.dtype.itemsize
                        + N * Cmul * HoWo * 4))

    # Single grid step: no per-image pipeline overhead, one weight DMA, one
    # MXU weight push amortized over the 512-wide lane pass.
    # TODO(synk): for production H/W/Cmul, reintroduce a "parallel" grid over
    # (Cmul tiles x Ho row-strips with a p-row halo); tile Cmul to 128 (v5e) /
    # 256 (v6e/v7x), keep the output lane block a multiple of 128, size
    # double-buffered blocks against v7x's 64 MiB physical VMEM, raise
    # vmem_limit_bytes explicitly, and avoid int8 weights on v7x (fp8/bf16 only).
    out_flat = pl.pallas_call(
        _matmul_relu_kernel_factory(N, HoWo, activation),
        out_shape=jax.ShapeDtypeStruct((N, Cmul, HoWo), jnp.float32),
        grid=(1,),
        in_specs=[
            pl.BlockSpec((Cmul, K), lambda i: (0, 0)),
            pl.BlockSpec((K, N * HoWo), lambda i: (0, 0)),
        ],
        out_specs=pl.BlockSpec((N, Cmul, HoWo), lambda i: (0, 0, 0)),
        compiler_params=pltpu.CompilerParams(
            dimension_semantics=("arbitrary",)),
        cost_estimate=cost,
    )(w_mat, patches)

    # (N, Cmul, Ho*Wo) is bit-identical in memory to NCHW (N, Cmul, Ho, Wo), so
    # torch's .view(N, Cout, G, W, H) is a free reshape here (no transpose).
    return out_flat.reshape(N, Cout, group_order, Wo, Ho)


# ---------------------------------------------------------------------------
def _reference(x, kernel, relaxed_weights, group_order, activation=True):
    """Pure-JAX reference (same weight preprocessing, XLA conv)."""
    nfb, Cout, Cin, k, _ = kernel.shape
    N = x.shape[0]
    fb = generate_filter_bank(kernel, group_order)
    w_ref = jnp.einsum("na,noaikl->oaikl", relaxed_weights, fb).reshape(
        Cout * group_order, Cin, k, k)
    p = (k - 1) // 2
    ref = jax.lax.conv_general_dilated(
        x, w_ref, window_strides=(1, 1), padding=[(p, p), (p, p)],
        dimension_numbers=("NCHW", "OIHW", "NCHW"))
    if activation:
        ref = jnp.maximum(ref, 0.0)
    # matches torch's x.view(N, Cout, G, x.shape[-1], x.shape[-2])
    return ref.reshape(N, Cout, group_order, ref.shape[-1], ref.shape[-2])


if __name__ == "__main__":
    num_filter_banks = 2
    in_channels = 4
    out_channels = 4
    kernel_size = 3
    group_order = 4
    N, H, W = 2, 16, 16

    key = jax.random.PRNGKey(0)
    k_kernel, k_x, k_x2 = jax.random.split(key, 3)

    # kaiming_uniform_(a=sqrt(5)) -> bound = 1/sqrt(fan_in),
    # fan_in = dim1 * receptive_field = out_channels * in_channels * k * k
    fan_in = out_channels * in_channels * kernel_size * kernel_size
    bound = 1.0 / math.sqrt(fan_in)
    kernel = jax.random.uniform(
        k_kernel,
        (num_filter_banks, out_channels, in_channels, kernel_size, kernel_size),
        jnp.float32, minval=-bound, maxval=bound)
    relaxed_weights = jnp.ones((num_filter_banks, group_order), jnp.float32)
    x = jax.random.normal(k_x, (N, in_channels, H, W), jnp.float32)

    out = relaxed_rot_lift_conv2d(x, kernel, relaxed_weights, group_order,
                                  activation=True)
    out = jax.block_until_ready(out)
    ref = _reference(x, kernel, relaxed_weights, group_order, activation=True)
    assert out.shape == (N, out_channels, group_order, W, H), out.shape
    np.testing.assert_allclose(np.asarray(out), np.asarray(ref),
                               rtol=1e-4, atol=1e-4)

    # rectangular-input check (Ho != Wo) to confirm the .view semantics
    H2, W2 = 16, 12
    x_rect = jax.random.normal(k_x2, (N, in_channels, H2, W2), jnp.float32)
    out_rect = relaxed_rot_lift_conv2d(x_rect, kernel, relaxed_weights,
                                       group_order, activation=True)
    out_rect = jax.block_until_ready(out_rect)
    ref_rect = _reference(x_rect, kernel, relaxed_weights, group_order,
                          activation=True)
    assert out_rect.shape == (N, out_channels, group_order, W2, H2), out_rect.shape
    np.testing.assert_allclose(np.asarray(out_rect), np.asarray(ref_rect),
                               rtol=1e-4, atol=1e-4)

    # bf16 activation/weight variant (halves DMA bytes; valid on v5e/v6e/v7x)
    # — accumulation stays f32, so only input rounding differs.
    out_bf16 = relaxed_rot_lift_conv2d(x, kernel, relaxed_weights, group_order,
                                       activation=True,
                                       compute_dtype=jnp.bfloat16)
    out_bf16 = jax.block_until_ready(out_bf16)
    np.testing.assert_allclose(np.asarray(out_bf16), np.asarray(ref),
                               rtol=5e-2, atol=5e-2)

    print("KERNEL_OK")
</pallas_src>

<mosaic_0001>
module attributes {stable_mosaic.version = 11 : i64} {
  func.func @kernel(%arg0: i32, %arg1: memref<16x36xf32, #tpu.memory_space<vmem>>, %arg2: memref<36x512xf32, #tpu.memory_space<vmem>>, %arg3: memref<2x16x256xf32, #tpu.memory_space<vmem>>) attributes {dimension_semantics = [#tpu.dimension_semantics<arbitrary>], iteration_bounds = array<i64: 1>, scalar_prefetch = 0 : i64, scratch_operands = 0 : i64, tpu.core_type = #tpu.core_type<tc>, window_params = [{pipeline_mode = #tpu.pipeline_mode<synchronous>, transform_indices = @transform_0, window_bounds = array<i64: 16, 36>}, {pipeline_mode = #tpu.pipeline_mode<synchronous>, transform_indices = @transform_1, window_bounds = array<i64: 36, 512>}, {pipeline_mode = #tpu.pipeline_mode<synchronous>, transform_indices = @transform_2, window_bounds = array<i64: 2, 16, 256>}]} {
    %c0 = arith.constant 0 : index
    %c0_0 = arith.constant 0 : index
    %0 = vector.load %arg1[%c0, %c0_0] : memref<16x36xf32, #tpu.memory_space<vmem>>, vector<16x36xf32>
    %c0_1 = arith.constant 0 : index
    %c0_2 = arith.constant 0 : index
    %1 = vector.load %arg2[%c0_1, %c0_2] : memref<36x512xf32, #tpu.memory_space<vmem>>, vector<36x512xf32>
    %cst = arith.constant dense<0.000000e+00> : vector<16x512xf32>
    %2 = tpu.matmul %0, %1, %cst {dimension_numbers = #tpu.dot_dimension_numbers<[1], [0], [0], [1], [0, 0, 1, 1], [], []>} : vector<16x36xf32>, vector<36x512xf32>, vector<16x512xf32> -> vector<16x512xf32>
    %cst_3 = arith.constant 0.000000e+00 : f32
    %3 = vector.broadcast %cst_3 : f32 to vector<16x512xf32>
    %4 = arith.maximumf %2, %3 : vector<16x512xf32>
    %5 = vector.extract_strided_slice %4 {offsets = [0, 0], sizes = [16, 256], strides = [1, 1]} : vector<16x512xf32> to vector<16x256xf32>
    %c0_4 = arith.constant 0 : index
    %c0_5 = arith.constant 0 : index
    %c0_6 = arith.constant 0 : index
    %6 = vector.load %arg3[%c0_4, %c0_5, %c0_6] : memref<2x16x256xf32, #tpu.memory_space<vmem>>, vector<1x16x256xf32>
    %7 = vector.shape_cast %6 : vector<1x16x256xf32> to vector<16x256xf32>
    %8 = vector.shape_cast %5 : vector<16x256xf32> to vector<1x16x256xf32>
    tpu.vector_store %arg3[%c0_4, %c0_5, %c0_6], %8 {strides = array<i32>} : memref<2x16x256xf32, #tpu.memory_space<vmem>>, vector<1x16x256xf32>,
    %9 = vector.extract_strided_slice %4 {offsets = [0, 256], sizes = [16, 256], strides = [1, 1]} : vector<16x512xf32> to vector<16x256xf32>
    %c1 = arith.constant 1 : index
    %c0_7 = arith.constant 0 : index
    %c0_8 = arith.constant 0 : index
    %10 = vector.load %arg3[%c1, %c0_7, %c0_8] : memref<2x16x256xf32, #tpu.memory_space<vmem>>, vector<1x16x256xf32>
    %11 = vector.shape_cast %10 : vector<1x16x256xf32> to vector<16x256xf32>
    %12 = vector.shape_cast %9 : vector<16x256xf32> to vector<1x16x256xf32>
    tpu.vector_store %arg3[%c1, %c0_7, %c0_8], %12 {strides = array<i32>} : memref<2x16x256xf32, #tpu.memory_space<vmem>>, vector<1x16x256xf32>,
    return
  }
  func.func @transform_0(%arg0: i32) -> (i32, i32) {
    %c0_i32 = arith.constant 0 : i32
    %c0_i32_0 = arith.constant 0 : i32
    %c0_i32_1 = arith.constant 0 : i32
    return %c0_i32, %c0_i32_0 : i32, i32
  }
  func.func @transform_1(%arg0: i32) -> (i32, i32) {
    %c0_i32 = arith.constant 0 : i32
    %c0_i32_0 = arith.constant 0 : i32
    %c0_i32_1 = arith.constant 0 : i32
    return %c0_i32, %c0_i32_0 : i32, i32
  }
  func.func @transform_2(%arg0: i32) -> (i32, i32, i32) {
    %c0_i32 = arith.constant 0 : i32
    %c0_i32_0 = arith.constant 0 : i32
    %c0_i32_1 = arith.constant 0 : i32
    %c0_i32_2 = arith.constant 0 : i32
    return %c0_i32, %c0_i32_0, %c0_i32_1 : i32, i32, i32
  }
}

</mosaic_0001>

<llo_original>
// kernel: tpu_custom_call.1
$region0: #{tpu_custom_call.1}
  #allocation0 [shape = 'u32[]', space=smem, size = 0x4, offset = 0x4, fixed_abs, tag = 'smem constant byte address 0x4 - core index']
  #allocation1 [shape = 'u32[144,128]{1,0:T(1,128)}', space=vmem, size = 0x12000, scoped, tag = 'internal scratch']
  %s0 = inlined_call_operand.hbm [shape: f32[16,36], index: 0, kind: input, shape index: {}]
  %s1 = inlined_call_operand.hbm [shape: f32[36,512], index: 1, kind: input, shape index: {}]
  %s2 = inlined_call_operand.hbm [shape: f32[2,16,256], index: 2, kind: output, shape index: {}]
  %s3 = sld [smem:[#allocation0]]
  $region26: #{tpu_custom_call.1} parent=0
    _
  %s5 = ssub.s32 1, %s3
  %s6 = scalar_select 0, %s5, %s3
  $region1: #{tpu_custom_call.1} parent=0
    #allocation2 [shape = 'u8[8192]{0}', space=vmem, size = 0x2000, scoped, tag = 'input window, operand 0, single buffered']
    #allocation3 [shape = 's32[1]{0}', space=sflag, size = 0x4, scoped, tag = 'scoped memory for tpu_custom_call.1']
    #allocation4 [shape = 's32[1]{0}', space=sflag, size = 0x4, scoped, tag = 'scoped memory for tpu_custom_call.1']
    #allocation5 [shape = 'u8[81920]{0}', space=vmem, size = 0x14000, scoped, tag = 'input window, operand 1, single buffered']
    #allocation6 [shape = 's32[1]{0}', space=sflag, size = 0x4, scoped, tag = 'scoped memory for tpu_custom_call.1']
    #allocation7 [shape = 'u8[32768]{0}', space=vmem, size = 0x8000, scoped, tag = 'output window, operand 0, single buffered']
    %7 = vsyncpa [#allocation3], 0
    %8 = vsyncpa [#allocation6], 0
    %9 = vsyncpa [#allocation4], 0
    // Predicated region
    $region2: #{tpu_custom_call.1} parent=1 // pred_check
      _
    $region3: #{tpu_custom_call.1} parent=1 // pred_check_branch
      %11 = sbr.rel (0) target = $region5
    $region4: #{tpu_custom_call.1} parent=1 // pred_region
      %s13 = ssub.s32 256, 256
      %14 = vsyncadd [#allocation3], %s13
      %s15 = sshll.u32 [#allocation2], 4
      %s16 = int_to_ptr.vmem [resolvable:$true] %s15
      %21 = dma.hbm_to_vmem [thread:$0]  %s0, 256, %s16, [#allocation3], 128, 128, 8
    $region5: #{tpu_custom_call.1} parent=1 // pred_fallthru
      _
    // Predicated region
    $region6: #{tpu_custom_call.1} parent=1 // pred_check
      _
    $region7: #{tpu_custom_call.1} parent=1 // pred_check_branch
      %23 = sbr.rel (0) target = $region9
    $region8: #{tpu_custom_call.1} parent=1 // pred_region
      %s25 = ssub.s32 2560, 2560
      %26 = vsyncadd [#allocation6], %s25
      %s27 = sshll.u32 [#allocation5], 4
      %s28 = int_to_ptr.vmem [resolvable:$true] %s27
      %33 = dma.hbm_to_vmem [thread:$0]  %s1, 2560, %s28, [#allocation6], 512, 512, 32
    $region9: #{tpu_custom_call.1} parent=1 // pred_fallthru
      _
    // Predicated region
    $region10: #{tpu_custom_call.1} parent=1 // pred_check
      _
    $region11: #{tpu_custom_call.1} parent=1 // pred_check_branch
      %35 = sbr.rel (0) target = $region13
    $region12: #{tpu_custom_call.1} parent=1 // pred_region
      %36 = dma.done [#allocation3], 256
    $region13: #{tpu_custom_call.1} parent=1 // pred_fallthru
      _
    // Predicated region
    $region14: #{tpu_custom_call.1} parent=1 // pred_check
      _
    $region15: #{tpu_custom_call.1} parent=1 // pred_check_branch
      %38 = sbr.rel (0) target = $region17
    $region16: #{tpu_custom_call.1} parent=1 // pred_region
      %39 = dma.done [#allocation6], 2560
    $region17: #{tpu_custom_call.1} parent=1 // pred_fallthru
      _
    %v40 = vld [vmem:[#allocation2] sm:$0xff]
    %v41 = vld [vmem:[#allocation2 + $0x8] sm:$0xff]
    %v42 = vld [vmem:[#allocation5] sm:$0xff]
    %v43 = vld [vmem:[#allocation5 + $0x8] sm:$0xff]
    %v44 = vld [vmem:[#allocation5 + $0x10] sm:$0xff]
    %v45 = vld [vmem:[#allocation5 + $0x18] sm:$0xff]
    %v46 = vld [vmem:[#allocation5 + $0x20] sm:$0xff]
    %v47 = vld [vmem:[#allocation5 + $0x28] sm:$0xff]
    %v48 = vld [vmem:[#allocation5 + $0x30] sm:$0xff]
    %v49 = vld [vmem:[#allocation5 + $0x38] sm:$0xff]
    %v50 = vld [vmem:[#allocation5 + $0x40] sm:$0xff]
    %v51 = vld [vmem:[#allocation5 + $0x48] sm:$0xff]
    %v52 = vld [vmem:[#allocation5 + $0x50] sm:$0xff]
    %v53 = vld [vmem:[#allocation5 + $0x58] sm:$0xff]
    %v54 = vld [vmem:[#allocation5 + $0x60] sm:$0xff]
    %v55 = vld [vmem:[#allocation5 + $0x68] sm:$0xff]
    %v56 = vld [vmem:[#allocation5 + $0x70] sm:$0xff]
    %v57 = vld [vmem:[#allocation5 + $0x78] sm:$0xff]
    %v58 = vld [vmem:[#allocation5 + $0x80] sm:$0xf]
    %v59 = vld [vmem:[#allocation5 + $0x88] sm:$0xf]
    %v60 = vld [vmem:[#allocation5 + $0x90] sm:$0xf]
    %v61 = vld [vmem:[#allocation5 + $0x98] sm:$0xf]
    %vm62 = vcmask 293888
    %v64 = vsel %vm62, %v40, 0
    %v67 = vsel %vm62, %v41, 0
    %vm69 = vcmask 1043456
    %v71 = vsel %vm69, %v58, 0
    %v74 = vsel %vm69, %v59, 0
    %v77 = vsel %vm69, %v60, 0
    %v80 = vsel %vm69, %v61, 0
    %82 = vmatprep.subr.mxu0 %v43
    %83 = vmatpush1.msra.mxu0 %v42
    %84 = vmatprep.subr.mxu0 %v47
    %85 = vmatpush1.msra.mxu0 %v46
    %86 = vmatprep.subr.mxu0 %v51
    %87 = vmatpush1.msra.mxu0 %v50
    %88 = vmatprep.subr.mxu0 %v55
    %89 = vmatpush1.msra.mxu0 %v54
    %90 = vmatprep.subr.mxu0 %v74
    %91 = vmatpush1.msra.mxu0 %v71
    %92 = vmatprep.subr.mxu0 0.0
    %93 = vmatpush1.msra.mxu0 0.0
    %94 = vmatprep.subr.mxu0 0.0
    %95 = vmatpush1.msra.mxu0 0.0
    %96 = vmatprep.subr.mxu0 0.0
    %97 = vmatpush1.msra.mxu0 0.0
    %98 = vmatprep.subr.mxu0 0.0
    %99 = vmatpush1.msra.mxu0 0.0
    %100 = vmatprep.subr.mxu0 0.0
    %101 = vmatpush1.msra.mxu0 0.0
    %102 = vmatprep.subr.mxu0 0.0
    %103 = vmatpush1.msra.mxu0 0.0
    %104 = vmatprep.subr.mxu0 0.0
    %105 = vmatpush1.msra.mxu0 0.0
    %106 = vmatprep.subr.mxu0 0.0
    %107 = vmatpush1.msra.mxu0 0.0
    %108 = vmatprep.subr.mxu0 0.0
    %109 = vmatpush1.msra.mxu0 0.0
    %110 = vmatprep.subr.mxu0 0.0
    %111 = vmatpush1.msra.mxu0 0.0
    %112 = vmatprep.subr.mxu0 0.0
    %113 = vmatpush1.msra.mxu0 0.0
    %114 = vmatprep.subr.mxu0 0.0
    %115 = vmatpush1.msra.mxu0 0.0
    %116 = vmatprep.subr.mxu0 0.0
    %117 = vmatpush1.msra.mxu0 0.0
    %118 = vmatprep.subr.mxu0 0.0
    %119 = vmatpush1.msra.mxu0 0.0
    %120 = vmatprep.subr.mxu0 0.0
    %121 = vmatpush1.msra.mxu0 0.0
    %122 = vmatprep.subr.mxu0 0.0
    %123 = vmatpush1.msra.mxu0 0.0
    %124 = vmatprep.subr.mxu0 0.0
    %125 = vmatpush1.msra.mxu0 0.0
    %126 = vmatprep.subr.mxu0 0.0
    %127 = vmatpush1.msra.mxu0 0.0
    %128 = vmatprep.subr.mxu0 0.0
    %129 = vmatpush1.msra.mxu0 0.0
    %130 = vmatprep.subr.mxu0 0.0
    %131 = vmatpush1.msra.mxu0 0.0
    %132 = vmatprep.subr.mxu0 0.0
    %133 = vmatpush1.msra.mxu0 0.0
    %134 = vmatprep.subr.mxu0 0.0
    %135 = vmatpush1.msra.mxu0 0.0
    %136 = vmatprep.subr.mxu0 0.0
    %137 = vmatpush1.msra.mxu0 0.0
    %138 = vmatprep.subr.mxu0 0.0
    %139 = vmatpush1.msra.mxu0 0.0
    %140 = vmatprep.subr.mxu0 0.0
    %141 = vmatpush1.msra.mxu0 0.0
    %142 = vmatprep.subr.mxu0 0.0
    %143 = vmatpush1.msra.mxu0 0.0
    %144 = vmatprep.subr.mxu0 0.0
    %145 = vmatpush1.msra.mxu0 0.0
    %146 = vmatprep.mubr.f32.mxu0 0.0
    %147 = vmatmul.mubr.f32.gmra.mrb[0].mxu0 %v64
    %v148 = vpop.f32.mrb[0].mxu0
    %v149 = vadd.f32 0.0, %v148
    %v150 = vpop.f32.mrb[0].mxu0
    %v151 = vadd.f32 0.0, %v150
    %152 = vmatprep.mubr.f32.mxu0 0.0
    %153 = vmatmul.mubr.f32.gmra.mrb[0].mxu0 %v67
    %v154 = vpop.f32.mrb[0].mxu0
    %v155 = vadd.f32 0.0, %v154
    %v156 = vpop.f32.mrb[0].mxu0
    %v157 = vadd.f32 0.0, %v156
    %158 = vdwg.mxu0
    %159 = vmatprep.subr.mxu0 %v45
    %160 = vmatpush1.msra.mxu0 %v44
    %161 = vmatprep.subr.mxu0 %v49
    %162 = vmatpush1.msra.mxu0 %v48
    %163 = vmatprep.subr.mxu0 %v53
    %164 = vmatpush1.msra.mxu0 %v52
    %165 = vmatprep.subr.mxu0 %v57
    %166 = vmatpush1.msra.mxu0 %v56
    %167 = vmatprep.subr.mxu0 %v80
    %168 = vmatpush1.msra.mxu0 %v77
    %169 = vmatprep.subr.mxu0 0.0
    %170 = vmatpush1.msra.mxu0 0.0
    %171 = vmatprep.subr.mxu0 0.0
    %172 = vmatpush1.msra.mxu0 0.0
    %173 = vmatprep.subr.mxu0 0.0
    %174 = vmatpush1.msra.mxu0 0.0
    %175 = vmatprep.subr.mxu0 0.0
    %176 = vmatpush1.msra.mxu0 0.0
    %177 = vmatprep.subr.mxu0 0.0
    %178 = vmatpush1.msra.mxu0 0.0
    %179 = vmatprep.subr.mxu0 0.0
    %180 = vmatpush1.msra.mxu0 0.0
    %181 = vmatprep.subr.mxu0 0.0
    %182 = vmatpush1.msra.mxu0 0.0
    %183 = vmatprep.subr.mxu0 0.0
    %184 = vmatpush1.msra.mxu0 0.0
    %185 = vmatprep.subr.mxu0 0.0
    %186 = vmatpush1.msra.mxu0 0.0
    %187 = vmatprep.subr.mxu0 0.0
    %188 = vmatpush1.msra.mxu0 0.0
    %189 = vmatprep.subr.mxu0 0.0
    %190 = vmatpush1.msra.mxu0 0.0
    %191 = vmatprep.subr.mxu0 0.0
    %192 = vmatpush1.msra.mxu0 0.0
    %193 = vmatprep.subr.mxu0 0.0
    %194 = vmatpush1.msra.mxu0 0.0
    %195 = vmatprep.subr.mxu0 0.0
    %196 = vmatpush1.msra.mxu0 0.0
    %197 = vmatprep.subr.mxu0 0.0
    %198 = vmatpush1.msra.mxu0 0.0
    %199 = vmatprep.subr.mxu0 0.0
    %200 = vmatpush1.msra.mxu0 0.0
    %201 = vmatprep.subr.mxu0 0.0
    %202 = vmatpush1.msra.mxu0 0.0
    %203 = vmatprep.subr.mxu0 0.0
    %204 = vmatpush1.msra.mxu0 0.0
    %205 = vmatprep.subr.mxu0 0.0
    %206 = vmatpush1.msra.mxu0 0.0
    %207 = vmatprep.subr.mxu0 0.0
    %208 = vmatpush1.msra.mxu0 0.0
    %209 = vmatprep.subr.mxu0 0.0
    %210 = vmatpush1.msra.mxu0 0.0
    %211 = vmatprep.subr.mxu0 0.0
    %212 = vmatpush1.msra.mxu0 0.0
    %213 = vmatprep.subr.mxu0 0.0
    %214 = vmatpush1.msra.mxu0 0.0
    %215 = vmatprep.subr.mxu0 0.0
    %216 = vmatpush1.msra.mxu0 0.0
    %217 = vmatprep.subr.mxu0 0.0
    %218 = vmatpush1.msra.mxu0 0.0
    %219 = vmatprep.subr.mxu0 0.0
    %220 = vmatpush1.msra.mxu0 0.0
    %221 = vmatprep.subr.mxu0 0.0
    %222 = vmatpush1.msra.mxu0 0.0
    %223 = vmatprep.mubr.f32.mxu0 0.0
    %224 = vmatmul.mubr.f32.gmra.mrb[0].mxu0 %v64
    %v225 = vpop.f32.mrb[0].mxu0
    %v226 = vadd.f32 0.0, %v225
    %v227 = vpop.f32.mrb[0].mxu0
    %v228 = vadd.f32 0.0, %v227
    %229 = vmatprep.mubr.f32.mxu0 0.0
    %230 = vmatmul.mubr.f32.gmra.mrb[0].mxu0 %v67
    %v231 = vpop.f32.mrb[0].mxu0
    %v232 = vadd.f32 0.0, %v231
    %v233 = vpop.f32.mrb[0].mxu0
    %v234 = vadd.f32 0.0, %v233
    %235 = vdwg.mxu0
    %v236 = vmax.f32 %v149, 0.0
    %v237 = vmax.f32 %v151, 0.0
    %v238 = vmax.f32 %v226, 0.0
    %v239 = vmax.f32 %v228, 0.0
    %v240 = vmax.f32 %v155, 0.0
    %v241 = vmax.f32 %v157, 0.0
    %v242 = vmax.f32 %v232, 0.0
    %v243 = vmax.f32 %v234, 0.0
    %244 = vst [vmem:[#allocation7] sm:$0xff] %v236
    %245 = vst [vmem:[#allocation7 + $0x8] sm:$0xff] %v237
    %246 = vst [vmem:[#allocation7 + $0x10] sm:$0xff] %v240
    %247 = vst [vmem:[#allocation7 + $0x18] sm:$0xff] %v241
    %s248 = scalar_lea.vmem [#allocation7], 32
    %249 = vst [vmem:[%s248] sm:$0xff] %v238
    %250 = vst [vmem:[%s248 + $0x8] sm:$0xff] %v239
    %251 = vst [vmem:[%s248 + $0x10] sm:$0xff] %v242
    %252 = vst [vmem:[%s248 + $0x18] sm:$0xff] %v243
    // Predicated region
    $region18: #{tpu_custom_call.1} parent=1 // pred_check
      _
    $region19: #{tpu_custom_call.1} parent=1 // pred_check_branch
      %254 = sbr.rel (0) target = $region21
    $region20: #{tpu_custom_call.1} parent=1 // pred_region
      %s256 = ssub.s32 1024, 1024
      %257 = vsyncadd [#allocation4], %s256
      %s258 = sshll.u32 [#allocation7], 4
      %s259 = int_to_ptr.vmem [resolvable:$true] %s258
      %264 = dma.vmem_to_hbm [thread:$0]  %s259, 1024, %s2, [#allocation4], 256, 256, 16
    $region21: #{tpu_custom_call.1} parent=1 // pred_fallthru
      _
    // Predicated region
    $region22: #{tpu_custom_call.1} parent=1 // pred_check
      _
    $region23: #{tpu_custom_call.1} parent=1 // pred_check_branch
      %266 = sbr.rel (0) target = $region25
    $region24: #{tpu_custom_call.1} parent=1 // pred_region
      %267 = dma.done [#allocation4], 1024
    $region25: #{tpu_custom_call.1} parent=1 // pred_fallthru
      _
    %268 = vsyncpa [#allocation3], 1
    %269 = vsyncpa [#allocation6], 1
    %270 = vsyncpa [#allocation4], 1

</llo_original>
